<compile_context>
chip_gen: v7x
topology: tpu7x:2x2x1
jax: 0.10.0
libtpu: 0.0.40
codegen_flags: <defaults>
</compile_context>

<pallas_src>
import jax
import jax.numpy as jnp
from jax.experimental import pallas as pl
from jax.experimental.pallas import tpu as pltpu


def _round_up(x, m):
    return ((x + m - 1) // m) * m


def _make_outconv_kernel_vpu(batch, c_in, c_out):
    """Tiny-channel path: 2D (B*C, thw) blocks, unrolled VPU MACs, ci-outer loop."""

    def kernel(w_ref, b_ref, x_ref, o_ref):
        # w_ref: (C_out, C_in) SMEM, b_ref: (C_out,) SMEM
        # x_ref: (B*C_in, thw) VMEM, o_ref: (B*C_out, thw) VMEM (lane axis = thw)
        for b in range(batch):
            accs = [None] * c_out
            for ci in range(c_in):
                r = b * c_in + ci
                xi = x_ref[r:r + 1, :].astype(jnp.float32)  # load + cast once per input row
                for co in range(c_out):
                    t = xi * w_ref[co, ci]
                    accs[co] = t if accs[co] is None else accs[co] + t
            for co in range(c_out):
                o_ref[b * c_out + co:b * c_out + co + 1, :] = (
                    accs[co] + b_ref[co]).astype(o_ref.dtype)

    return kernel


def _make_outconv_kernel_mxu(batch):
    """Larger-channel path: 3D (B, C, thw) blocks, per-batch MXU dot."""

    def kernel(w_ref, b_ref, x_ref, o_ref):
        # w_ref: (C_out, C_in) VMEM, b_ref: (C_out, 1) VMEM
        # x_ref: (B, C_in, thw) VMEM, o_ref: (B, C_out, thw) VMEM
        w = w_ref[...].astype(jnp.float32)
        bias = b_ref[...].astype(jnp.float32)  # (C_out, 1)
        for b in range(batch):
            acc = jnp.dot(w, x_ref[b].astype(jnp.float32),
                          preferred_element_type=jnp.float32)
            o_ref[b] = (acc + bias).astype(o_ref.dtype)

    return kernel


def _pick_lane_tile(hw, bytes_per_lane, *, step_byte_budget=4 << 20,
                    max_lanes=65536, min_split_bytes=1 << 20):
    """Pick (lane tile, padded spatial extent).

    Each grid step is sized to move ~step_byte_budget of in+out HBM traffic so the
    kernel is DMA-bound rather than per-step-overhead bound. A single-step grid is
    split (for v7x's 2 TensorCores) only when each resulting step still moves
    >= min_split_bytes; otherwise splitting is pure overhead on single-TC v5e/v6e.
    """
    hw128 = _round_up(hw, 128)
    budget_lanes = max(128, (step_byte_budget // max(bytes_per_lane, 1)) // 128 * 128)
    budget_lanes = min(budget_lanes, max_lanes)
    n_steps = pl.cdiv(hw128, budget_lanes)
    thw = min(_round_up(pl.cdiv(hw128, n_steps), 128), hw128)
    if n_steps == 1 and hw128 * bytes_per_lane >= 2 * min_split_bytes and hw128 >= 256:
        thw = _round_up(pl.cdiv(hw128, 2), 128)
    grid = pl.cdiv(hw128, thw)
    return thw, grid * thw


def outconv_pallas(x_nchw, weight, bias, *, step_byte_budget=4 << 20, mxu_threshold=128):
    """1x1 conv (nn.Conv2d(in_ch, out_ch, 1)), NCHW in / NCHW out.

    weight: [C_out, C_in, 1, 1], bias: [C_out].
    """
    B, C_in, H, W = x_nchw.shape
    C_out = weight.shape[0]
    HW = H * W
    dtype_bytes = jnp.dtype(x_nchw.dtype).itemsize

    w_mat = weight.reshape(C_out, C_in)

    # HBM bytes moved per spatial lane (input + output) -> sizes the lane tile.
    bytes_per_lane = (B * C_in + B * C_out) * dtype_bytes
    thw, hw_pad = _pick_lane_tile(HW, bytes_per_lane, step_byte_budget=step_byte_budget)
    grid = (hw_pad // thw,)

    cost = pl.CostEstimate(
        flops=2 * B * HW * C_in * C_out,
        transcendentals=0,
        bytes_accessed=(B * (C_in + C_out) * HW + C_out * (C_in + 1)) * dtype_bytes,
    )
    cparams = pltpu.CompilerParams(dimension_semantics=("parallel",))

    use_mxu = (C_in * C_out) >= mxu_threshold

    if not use_mxu:
        # ---- Tiny-channel VPU path ------------------------------------------------
        # (B, C, H, W) -> (B*C, HW) is a metadata-only reshape of a contiguous array:
        # full sublane density for the input slab, minimal output sublane padding.
        x2 = x_nchw.reshape(B * C_in, HW)
        if hw_pad != HW:
            x2 = jnp.pad(x2, ((0, 0), (0, hw_pad - HW)))
        out2 = pl.pallas_call(
            _make_outconv_kernel_vpu(B, C_in, C_out),
            out_shape=jax.ShapeDtypeStruct((B * C_out, hw_pad), x_nchw.dtype),
            grid_spec=pltpu.PrefetchScalarGridSpec(
                num_scalar_prefetch=0,
                grid=grid,
                in_specs=[
                    # Weight/bias scalars live in SMEM (scalar path) so vector slots
                    # stay free for the streaming loads/stores.
                    pl.BlockSpec(memory_space=pltpu.MemorySpace.SMEM),  # weight (C_out, C_in)
                    pl.BlockSpec(memory_space=pltpu.MemorySpace.SMEM),  # bias   (C_out,)
                    pl.BlockSpec((B * C_in, thw), lambda i: (0, i)),
                ],
                out_specs=pl.BlockSpec((B * C_out, thw), lambda i: (0, i)),
            ),
            compiler_params=cparams,
            cost_estimate=cost,
        )(w_mat, bias, x2)
        out = out2 if hw_pad == HW else out2[:, :HW]
        return out.reshape(B, C_out, H, W)

    # ---- MXU path for non-trivial channel counts ----------------------------------
    x3 = x_nchw.reshape(B, C_in, HW)
    if hw_pad != HW:
        x3 = jnp.pad(x3, ((0, 0), (0, 0), (0, hw_pad - HW)))
    out3 = pl.pallas_call(
        _make_outconv_kernel_mxu(B),
        out_shape=jax.ShapeDtypeStruct((B, C_out, hw_pad), x_nchw.dtype),
        grid_spec=pltpu.PrefetchScalarGridSpec(
            num_scalar_prefetch=0,
            grid=grid,
            in_specs=[
                pl.BlockSpec((C_out, C_in), lambda i: (0, 0)),   # weight in VMEM for MXU
                pl.BlockSpec((C_out, 1), lambda i: (0, 0)),      # bias column
                pl.BlockSpec((B, C_in, thw), lambda i: (0, 0, i)),
            ],
            out_specs=pl.BlockSpec((B, C_out, thw), lambda i: (0, 0, i)),
        ),
        compiler_params=cparams,
        cost_estimate=cost,
    )(w_mat, bias.reshape(C_out, 1), x3)
    out = out3 if hw_pad == HW else out3[:, :, :HW]
    return out.reshape(B, C_out, H, W)


if __name__ == "__main__":
    # Module config: outconv(in_ch=4, out_ch=3); input x: [2, 4, 16, 16] (NCHW)
    B, C_in, C_out, H, W = 2, 4, 3, 16, 16

    key = jax.random.PRNGKey(0)
    kx, kw, kb = jax.random.split(key, 3)

    x = jax.random.normal(kx, (B, C_in, H, W), dtype=jnp.float32)
    # Deterministic param init mimicking nn.Conv2d default (uniform in +-1/sqrt(fan_in))
    bound = 1.0 / (C_in ** 0.5)
    weight = jax.random.uniform(kw, (C_out, C_in, 1, 1), jnp.float32, -bound, bound)
    bias = jax.random.uniform(kb, (C_out,), jnp.float32, -bound, bound)

    out = jax.block_until_ready(outconv_pallas(x, weight, bias))

    # Reference check against plain JAX (same semantics as F.conv2d with a 1x1 kernel)
    ref = jnp.einsum("bchw,oc->bohw", x, weight.reshape(C_out, C_in)) + bias[None, :, None, None]
    assert out.shape == (B, C_out, H, W)
    assert jnp.allclose(out, ref, atol=1e-5), "mismatch vs reference"

    print("KERNEL_OK")
</pallas_src>

<mosaic_0001>
module attributes {stable_mosaic.version = 11 : i64} {
  func.func @kernel(%arg0: i32, %arg1: memref<3x4xf32, #tpu.memory_space<smem>>, %arg2: memref<3xf32, #tpu.memory_space<smem>>, %arg3: memref<8x256xf32, #tpu.memory_space<vmem>>, %arg4: memref<6x256xf32, #tpu.memory_space<vmem>>) attributes {dimension_semantics = [#tpu.dimension_semantics<parallel>], iteration_bounds = array<i64: 1>, scalar_prefetch = 0 : i64, scratch_operands = 0 : i64, tpu.core_type = #tpu.core_type<tc>, window_params = [{transform_indices = @transform_0, window_bounds = array<i64: 3, 4>}, {transform_indices = @transform_1, window_bounds = array<i64: 3>}, {transform_indices = @transform_2, window_bounds = array<i64: 8, 256>}, {transform_indices = @transform_3, window_bounds = array<i64: 6, 256>}]} {
    %c0 = arith.constant 0 : index
    %c0_0 = arith.constant 0 : index
    %0 = vector.load %arg3[%c0, %c0_0] : memref<8x256xf32, #tpu.memory_space<vmem>>, vector<1x256xf32>
    %c0_1 = arith.constant 0 : index
    %c0_2 = arith.constant 0 : index
    %1 = memref.load %arg1[%c0_1, %c0_2] : memref<3x4xf32, #tpu.memory_space<smem>>
    %2 = vector.broadcast %1 : f32 to vector<1x256xf32>
    %3 = arith.mulf %0, %2 : vector<1x256xf32>
    %c1 = arith.constant 1 : index
    %c0_3 = arith.constant 0 : index
    %4 = memref.load %arg1[%c1, %c0_3] : memref<3x4xf32, #tpu.memory_space<smem>>
    %5 = vector.broadcast %4 : f32 to vector<1x256xf32>
    %6 = arith.mulf %0, %5 : vector<1x256xf32>
    %c2 = arith.constant 2 : index
    %c0_4 = arith.constant 0 : index
    %7 = memref.load %arg1[%c2, %c0_4] : memref<3x4xf32, #tpu.memory_space<smem>>
    %8 = vector.broadcast %7 : f32 to vector<1x256xf32>
    %9 = arith.mulf %0, %8 : vector<1x256xf32>
    %c1_5 = arith.constant 1 : index
    %c0_6 = arith.constant 0 : index
    %10 = vector.load %arg3[%c1_5, %c0_6] : memref<8x256xf32, #tpu.memory_space<vmem>>, vector<1x256xf32>
    %c0_7 = arith.constant 0 : index
    %c1_8 = arith.constant 1 : index
    %11 = memref.load %arg1[%c0_7, %c1_8] : memref<3x4xf32, #tpu.memory_space<smem>>
    %12 = vector.broadcast %11 : f32 to vector<1x256xf32>
    %13 = arith.mulf %10, %12 : vector<1x256xf32>
    %14 = arith.addf %3, %13 : vector<1x256xf32>
    %c1_9 = arith.constant 1 : index
    %c1_10 = arith.constant 1 : index
    %15 = memref.load %arg1[%c1_9, %c1_10] : memref<3x4xf32, #tpu.memory_space<smem>>
    %16 = vector.broadcast %15 : f32 to vector<1x256xf32>
    %17 = arith.mulf %10, %16 : vector<1x256xf32>
    %18 = arith.addf %6, %17 : vector<1x256xf32>
    %c2_11 = arith.constant 2 : index
    %c1_12 = arith.constant 1 : index
    %19 = memref.load %arg1[%c2_11, %c1_12] : memref<3x4xf32, #tpu.memory_space<smem>>
    %20 = vector.broadcast %19 : f32 to vector<1x256xf32>
    %21 = arith.mulf %10, %20 : vector<1x256xf32>
    %22 = arith.addf %9, %21 : vector<1x256xf32>
    %c2_13 = arith.constant 2 : index
    %c0_14 = arith.constant 0 : index
    %23 = vector.load %arg3[%c2_13, %c0_14] : memref<8x256xf32, #tpu.memory_space<vmem>>, vector<1x256xf32>
    %c0_15 = arith.constant 0 : index
    %c2_16 = arith.constant 2 : index
    %24 = memref.load %arg1[%c0_15, %c2_16] : memref<3x4xf32, #tpu.memory_space<smem>>
    %25 = vector.broadcast %24 : f32 to vector<1x256xf32>
    %26 = arith.mulf %23, %25 : vector<1x256xf32>
    %27 = arith.addf %14, %26 : vector<1x256xf32>
    %c1_17 = arith.constant 1 : index
    %c2_18 = arith.constant 2 : index
    %28 = memref.load %arg1[%c1_17, %c2_18] : memref<3x4xf32, #tpu.memory_space<smem>>
    %29 = vector.broadcast %28 : f32 to vector<1x256xf32>
    %30 = arith.mulf %23, %29 : vector<1x256xf32>
    %31 = arith.addf %18, %30 : vector<1x256xf32>
    %c2_19 = arith.constant 2 : index
    %c2_20 = arith.constant 2 : index
    %32 = memref.load %arg1[%c2_19, %c2_20] : memref<3x4xf32, #tpu.memory_space<smem>>
    %33 = vector.broadcast %32 : f32 to vector<1x256xf32>
    %34 = arith.mulf %23, %33 : vector<1x256xf32>
    %35 = arith.addf %22, %34 : vector<1x256xf32>
    %c3 = arith.constant 3 : index
    %c0_21 = arith.constant 0 : index
    %36 = vector.load %arg3[%c3, %c0_21] : memref<8x256xf32, #tpu.memory_space<vmem>>, vector<1x256xf32>
    %c0_22 = arith.constant 0 : index
    %c3_23 = arith.constant 3 : index
    %37 = memref.load %arg1[%c0_22, %c3_23] : memref<3x4xf32, #tpu.memory_space<smem>>
    %38 = vector.broadcast %37 : f32 to vector<1x256xf32>
    %39 = arith.mulf %36, %38 : vector<1x256xf32>
    %40 = arith.addf %27, %39 : vector<1x256xf32>
    %c1_24 = arith.constant 1 : index
    %c3_25 = arith.constant 3 : index
    %41 = memref.load %arg1[%c1_24, %c3_25] : memref<3x4xf32, #tpu.memory_space<smem>>
    %42 = vector.broadcast %41 : f32 to vector<1x256xf32>
    %43 = arith.mulf %36, %42 : vector<1x256xf32>
    %44 = arith.addf %31, %43 : vector<1x256xf32>
    %c2_26 = arith.constant 2 : index
    %c3_27 = arith.constant 3 : index
    %45 = memref.load %arg1[%c2_26, %c3_27] : memref<3x4xf32, #tpu.memory_space<smem>>
    %46 = vector.broadcast %45 : f32 to vector<1x256xf32>
    %47 = arith.mulf %36, %46 : vector<1x256xf32>
    %48 = arith.addf %35, %47 : vector<1x256xf32>
    %c0_28 = arith.constant 0 : index
    %49 = memref.load %arg2[%c0_28] : memref<3xf32, #tpu.memory_space<smem>>
    %50 = vector.broadcast %49 : f32 to vector<1x256xf32>
    %51 = arith.addf %40, %50 : vector<1x256xf32>
    %c0_29 = arith.constant 0 : index
    %c0_30 = arith.constant 0 : index
    %52 = vector.load %arg4[%c0_29, %c0_30] : memref<6x256xf32, #tpu.memory_space<vmem>>, vector<1x256xf32>
    tpu.vector_store %arg4[%c0_29, %c0_30], %51 {strides = array<i32>} : memref<6x256xf32, #tpu.memory_space<vmem>>, vector<1x256xf32>,
    %c1_31 = arith.constant 1 : index
    %53 = memref.load %arg2[%c1_31] : memref<3xf32, #tpu.memory_space<smem>>
    %54 = vector.broadcast %53 : f32 to vector<1x256xf32>
    %55 = arith.addf %44, %54 : vector<1x256xf32>
    %c1_32 = arith.constant 1 : index
    %c0_33 = arith.constant 0 : index
    %56 = vector.load %arg4[%c1_32, %c0_33] : memref<6x256xf32, #tpu.memory_space<vmem>>, vector<1x256xf32>
    tpu.vector_store %arg4[%c1_32, %c0_33], %55 {strides = array<i32>} : memref<6x256xf32, #tpu.memory_space<vmem>>, vector<1x256xf32>,
    %c2_34 = arith.constant 2 : index
    %57 = memref.load %arg2[%c2_34] : memref<3xf32, #tpu.memory_space<smem>>
    %58 = vector.broadcast %57 : f32 to vector<1x256xf32>
    %59 = arith.addf %48, %58 : vector<1x256xf32>
    %c2_35 = arith.constant 2 : index
    %c0_36 = arith.constant 0 : index
    %60 = vector.load %arg4[%c2_35, %c0_36] : memref<6x256xf32, #tpu.memory_space<vmem>>, vector<1x256xf32>
    tpu.vector_store %arg4[%c2_35, %c0_36], %59 {strides = array<i32>} : memref<6x256xf32, #tpu.memory_space<vmem>>, vector<1x256xf32>,
    %c4 = arith.constant 4 : index
    %c0_37 = arith.constant 0 : index
    %61 = vector.load %arg3[%c4, %c0_37] : memref<8x256xf32, #tpu.memory_space<vmem>>, vector<1x256xf32>
    %c0_38 = arith.constant 0 : index
    %c0_39 = arith.constant 0 : index
    %62 = memref.load %arg1[%c0_38, %c0_39] : memref<3x4xf32, #tpu.memory_space<smem>>
    %63 = vector.broadcast %62 : f32 to vector<1x256xf32>
    %64 = arith.mulf %61, %63 : vector<1x256xf32>
    %c1_40 = arith.constant 1 : index
    %c0_41 = arith.constant 0 : index
    %65 = memref.load %arg1[%c1_40, %c0_41] : memref<3x4xf32, #tpu.memory_space<smem>>
    %66 = vector.broadcast %65 : f32 to vector<1x256xf32>
    %67 = arith.mulf %61, %66 : vector<1x256xf32>
    %c2_42 = arith.constant 2 : index
    %c0_43 = arith.constant 0 : index
    %68 = memref.load %arg1[%c2_42, %c0_43] : memref<3x4xf32, #tpu.memory_space<smem>>
    %69 = vector.broadcast %68 : f32 to vector<1x256xf32>
    %70 = arith.mulf %61, %69 : vector<1x256xf32>
    %c5 = arith.constant 5 : index
    %c0_44 = arith.constant 0 : index
    %71 = vector.load %arg3[%c5, %c0_44] : memref<8x256xf32, #tpu.memory_space<vmem>>, vector<1x256xf32>
    %c0_45 = arith.constant 0 : index
    %c1_46 = arith.constant 1 : index
    %72 = memref.load %arg1[%c0_45, %c1_46] : memref<3x4xf32, #tpu.memory_space<smem>>
    %73 = vector.broadcast %72 : f32 to vector<1x256xf32>
    %74 = arith.mulf %71, %73 : vector<1x256xf32>
    %75 = arith.addf %64, %74 : vector<1x256xf32>
    %c1_47 = arith.constant 1 : index
    %c1_48 = arith.constant 1 : index
    %76 = memref.load %arg1[%c1_47, %c1_48] : memref<3x4xf32, #tpu.memory_space<smem>>
    %77 = vector.broadcast %76 : f32 to vector<1x256xf32>
    %78 = arith.mulf %71, %77 : vector<1x256xf32>
    %79 = arith.addf %67, %78 : vector<1x256xf32>
    %c2_49 = arith.constant 2 : index
    %c1_50 = arith.constant 1 : index
    %80 = memref.load %arg1[%c2_49, %c1_50] : memref<3x4xf32, #tpu.memory_space<smem>>
    %81 = vector.broadcast %80 : f32 to vector<1x256xf32>
    %82 = arith.mulf %71, %81 : vector<1x256xf32>
    %83 = arith.addf %70, %82 : vector<1x256xf32>
    %c6 = arith.constant 6 : index
    %c0_51 = arith.constant 0 : index
    %84 = vector.load %arg3[%c6, %c0_51] : memref<8x256xf32, #tpu.memory_space<vmem>>, vector<1x256xf32>
    %c0_52 = arith.constant 0 : index
    %c2_53 = arith.constant 2 : index
    %85 = memref.load %arg1[%c0_52, %c2_53] : memref<3x4xf32, #tpu.memory_space<smem>>
    %86 = vector.broadcast %85 : f32 to vector<1x256xf32>
    %87 = arith.mulf %84, %86 : vector<1x256xf32>
    %88 = arith.addf %75, %87 : vector<1x256xf32>
    %c1_54 = arith.constant 1 : index
    %c2_55 = arith.constant 2 : index
    %89 = memref.load %arg1[%c1_54, %c2_55] : memref<3x4xf32, #tpu.memory_space<smem>>
    %90 = vector.broadcast %89 : f32 to vector<1x256xf32>
    %91 = arith.mulf %84, %90 : vector<1x256xf32>
    %92 = arith.addf %79, %91 : vector<1x256xf32>
    %c2_56 = arith.constant 2 : index
    %c2_57 = arith.constant 2 : index
    %93 = memref.load %arg1[%c2_56, %c2_57] : memref<3x4xf32, #tpu.memory_space<smem>>
    %94 = vector.broadcast %93 : f32 to vector<1x256xf32>
    %95 = arith.mulf %84, %94 : vector<1x256xf32>
    %96 = arith.addf %83, %95 : vector<1x256xf32>
    %c7 = arith.constant 7 : index
    %c0_58 = arith.constant 0 : index
    %97 = vector.load %arg3[%c7, %c0_58] : memref<8x256xf32, #tpu.memory_space<vmem>>, vector<1x256xf32>
    %c0_59 = arith.constant 0 : index
    %c3_60 = arith.constant 3 : index
    %98 = memref.load %arg1[%c0_59, %c3_60] : memref<3x4xf32, #tpu.memory_space<smem>>
    %99 = vector.broadcast %98 : f32 to vector<1x256xf32>
    %100 = arith.mulf %97, %99 : vector<1x256xf32>
    %101 = arith.addf %88, %100 : vector<1x256xf32>
    %c1_61 = arith.constant 1 : index
    %c3_62 = arith.constant 3 : index
    %102 = memref.load %arg1[%c1_61, %c3_62] : memref<3x4xf32, #tpu.memory_space<smem>>
    %103 = vector.broadcast %102 : f32 to vector<1x256xf32>
    %104 = arith.mulf %97, %103 : vector<1x256xf32>
    %105 = arith.addf %92, %104 : vector<1x256xf32>
    %c2_63 = arith.constant 2 : index
    %c3_64 = arith.constant 3 : index
    %106 = memref.load %arg1[%c2_63, %c3_64] : memref<3x4xf32, #tpu.memory_space<smem>>
    %107 = vector.broadcast %106 : f32 to vector<1x256xf32>
    %108 = arith.mulf %97, %107 : vector<1x256xf32>
    %109 = arith.addf %96, %108 : vector<1x256xf32>
    %c0_65 = arith.constant 0 : index
    %110 = memref.load %arg2[%c0_65] : memref<3xf32, #tpu.memory_space<smem>>
    %111 = vector.broadcast %110 : f32 to vector<1x256xf32>
    %112 = arith.addf %101, %111 : vector<1x256xf32>
    %c3_66 = arith.constant 3 : index
    %c0_67 = arith.constant 0 : index
    %113 = vector.load %arg4[%c3_66, %c0_67] : memref<6x256xf32, #tpu.memory_space<vmem>>, vector<1x256xf32>
    tpu.vector_store %arg4[%c3_66, %c0_67], %112 {strides = array<i32>} : memref<6x256xf32, #tpu.memory_space<vmem>>, vector<1x256xf32>,
    %c1_68 = arith.constant 1 : index
    %114 = memref.load %arg2[%c1_68] : memref<3xf32, #tpu.memory_space<smem>>
    %115 = vector.broadcast %114 : f32 to vector<1x256xf32>
    %116 = arith.addf %105, %115 : vector<1x256xf32>
    %c4_69 = arith.constant 4 : index
    %c0_70 = arith.constant 0 : index
    %117 = vector.load %arg4[%c4_69, %c0_70] : memref<6x256xf32, #tpu.memory_space<vmem>>, vector<1x256xf32>
    tpu.vector_store %arg4[%c4_69, %c0_70], %116 {strides = array<i32>} : memref<6x256xf32, #tpu.memory_space<vmem>>, vector<1x256xf32>,
    %c2_71 = arith.constant 2 : index
    %118 = memref.load %arg2[%c2_71] : memref<3xf32, #tpu.memory_space<smem>>
    %119 = vector.broadcast %118 : f32 to vector<1x256xf32>
    %120 = arith.addf %109, %119 : vector<1x256xf32>
    %c5_72 = arith.constant 5 : index
    %c0_73 = arith.constant 0 : index
    %121 = vector.load %arg4[%c5_72, %c0_73] : memref<6x256xf32, #tpu.memory_space<vmem>>, vector<1x256xf32>
    tpu.vector_store %arg4[%c5_72, %c0_73], %120 {strides = array<i32>} : memref<6x256xf32, #tpu.memory_space<vmem>>, vector<1x256xf32>,
    return
  }
  func.func @transform_0(%arg0: i32) -> (i32, i32) {
    %c0_i32 = arith.constant 0 : i32
    %c0_i32_0 = arith.constant 0 : i32
    %c0_i32_1 = arith.constant 0 : i32
    return %c0_i32, %c0_i32_0 : i32, i32
  }
  func.func @transform_1(%arg0: i32) -> i32 {
    %c0_i32 = arith.constant 0 : i32
    %c0_i32_0 = arith.constant 0 : i32
    return %c0_i32 : i32
  }
  func.func @transform_2(%arg0: i32) -> (i32, i32) {
    %c0_i32 = arith.constant 0 : i32
    %c0_i32_0 = arith.constant 0 : i32
    return %c0_i32, %arg0 : i32, i32
  }
  func.func @transform_3(%arg0: i32) -> (i32, i32) {
    %c0_i32 = arith.constant 0 : i32
    %c0_i32_0 = arith.constant 0 : i32
    return %c0_i32, %arg0 : i32, i32
  }
}

</mosaic_0001>

<llo_original>
// kernel: tpu_custom_call.1
$region0: #{tpu_custom_call.1}
  #allocation0 [shape = 'u32[]', space=smem, size = 0x4, offset = 0x4, fixed_abs, tag = 'smem constant byte address 0x4 - core index']
  #allocation1 [shape = 'u32[144,128]{1,0:T(1,128)}', space=vmem, size = 0x12000, scoped, tag = 'internal scratch']
  %s0 = inlined_call_operand.hbm [shape: f32[3,4], index: 0, kind: input, shape index: {}]
  %s1 = inlined_call_operand.vmem [shape: f32[3], index: 1, kind: input, shape index: {}]
  %s2 = inlined_call_operand.hbm [shape: f32[8,256], index: 2, kind: input, shape index: {}]
  %s3 = inlined_call_operand.hbm [shape: f32[6,256], index: 3, kind: output, shape index: {}]
  %s4 = sld [smem:[#allocation0]]
  $region34: #{tpu_custom_call.1} parent=0
    _
  %s6 = ssub.s32 1, %s4
  %s7 = scalar_select 0, %s6, %s4
  $region1: #{tpu_custom_call.1} parent=0
    #allocation2 [shape = 'u8[2048]{0}', space=smem, size = 0x800, scoped, tag = 'input window, operand 0, single buffered']
    #allocation3 [shape = 's32[1]{0}', space=sflag, size = 0x4, scoped, tag = 'scoped memory for tpu_custom_call.1']
    #allocation4 [shape = 's32[1]{0}', space=sflag, size = 0x4, scoped, tag = 'scoped memory for tpu_custom_call.1']
    #allocation5 [shape = 's32[1]{0}', space=sflag, size = 0x4, scoped, tag = 'scoped memory for tpu_custom_call.1']
    #allocation6 [shape = 's32[1]{0}', space=sflag, size = 0x4, scoped, tag = 'scoped memory for tpu_custom_call.1']
    #allocation7 [shape = 'u8[512]{0}', space=smem, size = 0x200, scoped, tag = 'input window, operand 1, single buffered']
    #allocation8 [shape = 'u8[8192]{0}', space=vmem, size = 0x2000, scoped, tag = 'input window, operand 2, single buffered']
    #allocation9 [shape = 'u8[8192]{0}', space=vmem, size = 0x2000, scoped, tag = 'output window, operand 0, single buffered']
    %8 = vsyncpa [#allocation5], 0
    %9 = vsyncpa [#allocation6], 0
    %10 = vsyncpa [#allocation3], 0
    %11 = vsyncpa [#allocation4], 0
    // Predicated region
    $region2: #{tpu_custom_call.1} parent=1 // pred_check
      _
    $region3: #{tpu_custom_call.1} parent=1 // pred_check_branch
      %13 = sbr.rel (0) target = $region5
    $region4: #{tpu_custom_call.1} parent=1 // pred_region
      %s15 = ssub.s32 64, 64
      %16 = vsyncadd [#allocation5], %s15
      %19 = dma.hbm_to_smem %s0, 64, [#allocation2], [#allocation5]
    $region5: #{tpu_custom_call.1} parent=1 // pred_fallthru
      _
    // Predicated region
    $region6: #{tpu_custom_call.1} parent=1 // pred_check
      _
    $region7: #{tpu_custom_call.1} parent=1 // pred_check_branch
      %21 = sbr.rel (0) target = $region9
    $region8: #{tpu_custom_call.1} parent=1 // pred_region
      %s23 = ssub.s32 16, 16
      %24 = vsyncadd [#allocation6], %s23
      %s26 = sshll.u32 %s1, 4
      %s27 = int_to_ptr.vmem [resolvable:$true] %s26
      %29 = dma.vmem_to_smem %s27, 16, [#allocation7], [#allocation6]
    $region9: #{tpu_custom_call.1} parent=1 // pred_fallthru
      _
    // Predicated region
    $region10: #{tpu_custom_call.1} parent=1 // pred_check
      _
    $region11: #{tpu_custom_call.1} parent=1 // pred_check_branch
      %31 = sbr.rel (0) target = $region13
    $region12: #{tpu_custom_call.1} parent=1 // pred_region
      %s33 = ssub.s32 256, 256
      %34 = vsyncadd [#allocation3], %s33
      %s36 = sshll.u32 [#allocation8], 4
      %s37 = int_to_ptr.vmem [resolvable:$true] %s36
      %39 = dma.hbm_to_vmem [thread:$0]  %s2, 256, %s37, [#allocation3]
    $region13: #{tpu_custom_call.1} parent=1 // pred_fallthru
      _
    // Predicated region
    $region14: #{tpu_custom_call.1} parent=1 // pred_check
      _
    $region15: #{tpu_custom_call.1} parent=1 // pred_check_branch
      %41 = sbr.rel (0) target = $region17
    $region16: #{tpu_custom_call.1} parent=1 // pred_region
      %42 = dma.done [#allocation5], 64
    $region17: #{tpu_custom_call.1} parent=1 // pred_fallthru
      _
    // Predicated region
    $region18: #{tpu_custom_call.1} parent=1 // pred_check
      _
    $region19: #{tpu_custom_call.1} parent=1 // pred_check_branch
      %44 = sbr.rel (0) target = $region21
    $region20: #{tpu_custom_call.1} parent=1 // pred_region
      %45 = dma.done [#allocation6], 16
    $region21: #{tpu_custom_call.1} parent=1 // pred_fallthru
      _
    // Predicated region
    $region22: #{tpu_custom_call.1} parent=1 // pred_check
      _
    $region23: #{tpu_custom_call.1} parent=1 // pred_check_branch
      %47 = sbr.rel (0) target = $region25
    $region24: #{tpu_custom_call.1} parent=1 // pred_region
      %48 = dma.done [#allocation3], 256
    $region25: #{tpu_custom_call.1} parent=1 // pred_fallthru
      _
    %49 = sfence
    %v50 = vld [vmem:[#allocation8] ss:$8 sm:$0x3]
    %s51 = sld [smem:[#allocation2]]
    %v52 = vstv %s51
    %v53 = vmul.f32 %v50, %v52
    %s54 = sld [smem:[#allocation2 + $0x80]]
    %v55 = vstv %s54
    %v56 = vmul.f32 %v50, %v55
    %s57 = sld [smem:[#allocation2 + $0x100]]
    %v58 = vstv %s57
    %v59 = vmul.f32 %v50, %v58
    %s60 = scalar_lea.vmem [#allocation8], 1
    %v61 = vld [vmem:[%s60] ss:$8 sm:$0x3]
    %s62 = sld [smem:[#allocation2 + $0x1]]
    %v63 = vstv %s62
    %v64 = vmul.f32 %v61, %v63
    %v65 = vadd.f32 %v53, %v64
    %s66 = sld [smem:[#allocation2 + $0x81]]
    %v67 = vstv %s66
    %v68 = vmul.f32 %v61, %v67
    %v69 = vadd.f32 %v56, %v68
    %s70 = sld [smem:[#allocation2 + $0x101]]
    %v71 = vstv %s70
    %v72 = vmul.f32 %v61, %v71
    %v73 = vadd.f32 %v59, %v72
    %s74 = scalar_lea.vmem [#allocation8], 2
    %v75 = vld [vmem:[%s74] ss:$8 sm:$0x3]
    %s76 = sld [smem:[#allocation2 + $0x2]]
    %v77 = vstv %s76
    %v78 = vmul.f32 %v75, %v77
    %v79 = vadd.f32 %v65, %v78
    %s80 = sld [smem:[#allocation2 + $0x82]]
    %v81 = vstv %s80
    %v82 = vmul.f32 %v75, %v81
    %v83 = vadd.f32 %v69, %v82
    %s84 = sld [smem:[#allocation2 + $0x102]]
    %v85 = vstv %s84
    %v86 = vmul.f32 %v75, %v85
    %v87 = vadd.f32 %v73, %v86
    %s88 = scalar_lea.vmem [#allocation8], 3
    %v89 = vld [vmem:[%s88] ss:$8 sm:$0x3]
    %s90 = sld [smem:[#allocation2 + $0x3]]
    %v91 = vstv %s90
    %v92 = vmul.f32 %v89, %v91
    %v93 = vadd.f32 %v79, %v92
    %s94 = sld [smem:[#allocation2 + $0x83]]
    %v95 = vstv %s94
    %v96 = vmul.f32 %v89, %v95
    %v97 = vadd.f32 %v83, %v96
    %s98 = sld [smem:[#allocation2 + $0x103]]
    %v99 = vstv %s98
    %v100 = vmul.f32 %v89, %v99
    %v101 = vadd.f32 %v87, %v100
    %s102 = sld [smem:[#allocation7]]
    %v103 = vstv %s102
    %v104 = vadd.f32 %v93, %v103
    %v105 = vlaneseq
    %vm106 = vcmp.ge.s32.totalorder %v105, 0
    %vm107 = vcmp.lt.s32.totalorder %v105, 256
    %vm108 = vmand %vm106, %vm107
    %109 = vst.msk [vmem:[#allocation9] ss:$8 sm:$0x3] %vm108, %v104
    %110 = vst.msk [vmem:[#allocation9] ss:$8 sm:$0x0] %vm108, %v104
    %s111 = sld [smem:[#allocation7 + $0x1]]
    %v112 = vstv %s111
    %v113 = vadd.f32 %v97, %v112
    %s114 = scalar_lea.vmem [#allocation9], 1
    %115 = vst.msk [vmem:[%s114] ss:$8 sm:$0x3] %vm108, %v113
    %116 = vst.msk [vmem:[%s114] ss:$8 sm:$0x0] %vm108, %v113
    %s117 = sld [smem:[#allocation7 + $0x2]]
    %v118 = vstv %s117
    %v119 = vadd.f32 %v101, %v118
    %s120 = scalar_lea.vmem [#allocation9], 2
    %121 = vst.msk [vmem:[%s120] ss:$8 sm:$0x3] %vm108, %v119
    %122 = vst.msk [vmem:[%s120] ss:$8 sm:$0x0] %vm108, %v119
    %s123 = scalar_lea.vmem [#allocation8], 4
    %v124 = vld [vmem:[%s123] ss:$8 sm:$0x3]
    %s125 = sld [smem:[#allocation2]]
    %v126 = vstv %s125
    %v127 = vmul.f32 %v124, %v126
    %s128 = sld [smem:[#allocation2 + $0x80]]
    %v129 = vstv %s128
    %v130 = vmul.f32 %v124, %v129
    %s131 = sld [smem:[#allocation2 + $0x100]]
    %v132 = vstv %s131
    %v133 = vmul.f32 %v124, %v132
    %s134 = scalar_lea.vmem [#allocation8], 5
    %v135 = vld [vmem:[%s134] ss:$8 sm:$0x3]
    %s136 = sld [smem:[#allocation2 + $0x1]]
    %v137 = vstv %s136
    %v138 = vmul.f32 %v135, %v137
    %v139 = vadd.f32 %v127, %v138
    %s140 = sld [smem:[#allocation2 + $0x81]]
    %v141 = vstv %s140
    %v142 = vmul.f32 %v135, %v141
    %v143 = vadd.f32 %v130, %v142
    %s144 = sld [smem:[#allocation2 + $0x101]]
    %v145 = vstv %s144
    %v146 = vmul.f32 %v135, %v145
    %v147 = vadd.f32 %v133, %v146
    %s148 = scalar_lea.vmem [#allocation8], 6
    %v149 = vld [vmem:[%s148] ss:$8 sm:$0x3]
    %s150 = sld [smem:[#allocation2 + $0x2]]
    %v151 = vstv %s150
    %v152 = vmul.f32 %v149, %v151
    %v153 = vadd.f32 %v139, %v152
    %s154 = sld [smem:[#allocation2 + $0x82]]
    %v155 = vstv %s154
    %v156 = vmul.f32 %v149, %v155
    %v157 = vadd.f32 %v143, %v156
    %s158 = sld [smem:[#allocation2 + $0x102]]
    %v159 = vstv %s158
    %v160 = vmul.f32 %v149, %v159
    %v161 = vadd.f32 %v147, %v160
    %s162 = scalar_lea.vmem [#allocation8], 7
    %v163 = vld [vmem:[%s162] ss:$8 sm:$0x3]
    %s164 = sld [smem:[#allocation2 + $0x3]]
    %v165 = vstv %s164
    %v166 = vmul.f32 %v163, %v165
    %v167 = vadd.f32 %v153, %v166
    %s168 = sld [smem:[#allocation2 + $0x83]]
    %v169 = vstv %s168
    %v170 = vmul.f32 %v163, %v169
    %v171 = vadd.f32 %v157, %v170
    %s172 = sld [smem:[#allocation2 + $0x103]]
    %v173 = vstv %s172
    %v174 = vmul.f32 %v163, %v173
    %v175 = vadd.f32 %v161, %v174
    %s176 = sld [smem:[#allocation7]]
    %v177 = vstv %s176
    %v178 = vadd.f32 %v167, %v177
    %s179 = scalar_lea.vmem [#allocation9], 3
    %180 = vst.msk [vmem:[%s179] ss:$8 sm:$0x3] %vm108, %v178
    %181 = vst.msk [vmem:[%s179] ss:$8 sm:$0x0] %vm108, %v178
    %s182 = sld [smem:[#allocation7 + $0x1]]
    %v183 = vstv %s182
    %v184 = vadd.f32 %v171, %v183
    %s185 = scalar_lea.vmem [#allocation9], 4
    %186 = vst.msk [vmem:[%s185] ss:$8 sm:$0x3] %vm108, %v184
    %187 = vst.msk [vmem:[%s185] ss:$8 sm:$0x0] %vm108, %v184
    %s188 = sld [smem:[#allocation7 + $0x2]]
    %v189 = vstv %s188
    %v190 = vadd.f32 %v175, %v189
    %s191 = scalar_lea.vmem [#allocation9], 5
    %192 = vst.msk [vmem:[%s191] ss:$8 sm:$0x3] %vm108, %v190
    %193 = vst.msk [vmem:[%s191] ss:$8 sm:$0x0] %vm108, %v190
    // Predicated region
    $region26: #{tpu_custom_call.1} parent=1 // pred_check
      _
    $region27: #{tpu_custom_call.1} parent=1 // pred_check_branch
      %195 = sbr.rel (0) target = $region29
    $region28: #{tpu_custom_call.1} parent=1 // pred_region
      %s197 = ssub.s32 256, 256
      %198 = vsyncadd [#allocation4], %s197
      %s200 = sshll.u32 [#allocation9], 4
      %s201 = int_to_ptr.vmem [resolvable:$true] %s200
      %203 = dma.vmem_to_hbm [thread:$0]  %s201, 256, %s3, [#allocation4]
    $region29: #{tpu_custom_call.1} parent=1 // pred_fallthru
      _
    // Predicated region
    $region30: #{tpu_custom_call.1} parent=1 // pred_check
      _
    $region31: #{tpu_custom_call.1} parent=1 // pred_check_branch
      %205 = sbr.rel (0) target = $region33
    $region32: #{tpu_custom_call.1} parent=1 // pred_region
      %206 = dma.done [#allocation4], 256
    $region33: #{tpu_custom_call.1} parent=1 // pred_fallthru
      _
    %207 = vsyncpa [#allocation3], 1
    %208 = vsyncpa [#allocation4], 1
    %209 = vsyncpa [#allocation5], 1
    %210 = vsyncpa [#allocation6], 1

</llo_original>
